<compile_context>
chip_gen: v5e
topology: v5e:2x2
jax: 0.10.0
libtpu: 0.0.40
codegen_flags: <defaults>
</compile_context>

<pallas_src>
import functools

import jax
import jax.numpy as jnp
from jax.experimental import pallas as pl
from jax.experimental.pallas import tpu as pltpu


def _multihead_kernel(q_ref, k_ref, wq_ref, wkv_ref, o_ref, *, num_heads, key_dim):
    """One grid step handles B_blk batch elements; all heads in-kernel."""
    B, T_q, Dq = q_ref.shape
    _, T_k, Dk = k_ref.shape
    U = wq_ref.shape[1]
    d_h = U // num_heads
    scale = 1.0 / (float(key_dim) ** 0.5)

    # ---- Projections: bf16 MXU operands, f32 accumulation -------------------
    # Flatten (batch, seq) so the projection matmuls see tall MXU tiles.
    q2 = q_ref[...].reshape(B * T_q, Dq).astype(jnp.bfloat16)
    k2 = k_ref[...].reshape(B * T_k, Dk).astype(jnp.bfloat16)
    wq = wq_ref[...].astype(jnp.bfloat16)
    wkv = wkv_ref[...].astype(jnp.bfloat16)

    # Scale folded into Q (cheaper than scaling every per-head score tile).
    Q = jnp.dot(q2, wq, preferred_element_type=jnp.float32) * scale
    KV = jnp.dot(k2, wkv, preferred_element_type=jnp.float32)      # [B*T_k, 2U]

    # bf16 copies feed the attention-stage MXU ops (still f32 accumulation).
    Q3 = Q.reshape(B, T_q, U).astype(jnp.bfloat16)
    K3 = KV[:, :U].reshape(B, T_k, U).astype(jnp.bfloat16)
    V3 = KV[:, U:].reshape(B, T_k, U).astype(jnp.bfloat16)

    # ---- Per-head attention --------------------------------------------------
    # Static, unrolled head loop (H is small); transpose-free batched einsums.
    # TODO(synk): for very long T_k add a key-axis tile with an online softmax
    #             instead of materializing the full [B, T_q, T_k] score matrix.
    outs = []
    for h in range(num_heads):
        Qh = Q3[:, :, h * d_h:(h + 1) * d_h]          # [B, T_q, d_h]
        Kh = K3[:, :, h * d_h:(h + 1) * d_h]          # [B, T_k, d_h]
        Vh = V3[:, :, h * d_h:(h + 1) * d_h]          # [B, T_k, d_h]

        s = jnp.einsum('bqd,bkd->bqk', Qh, Kh,
                       preferred_element_type=jnp.float32)  # [B, T_q, T_k]
        # Numerically stable softmax over keys (matches F.softmax(dim=3)).
        s = s - jnp.max(s, axis=-1, keepdims=True)
        p = jnp.exp(s)
        denom = jnp.sum(p, axis=-1, keepdims=True)
        p = p * pl.reciprocal(denom)                  # exact; denom is tiny

        outs.append(jnp.einsum('bqk,bkd->bqd', p.astype(jnp.bfloat16), Vh,
                               preferred_element_type=jnp.float32))

    # Single fused output store; fully lane-dense whenever U % 128 == 0.
    o_ref[...] = jnp.concatenate(outs, axis=-1).astype(o_ref.dtype)


def _estimate_vmem_bytes(b, t_q, t_k, d_q, d_k, u):
    """Rough per-grid-step VMEM footprint (bytes) for batch-block size b."""
    f32, bf16 = 4, 2
    io_blocks = 2 * (b * t_q * d_q + b * t_k * d_k + b * t_q * u) * f32  # double-buffered I/O
    weights = 2 * (d_q * u + d_k * 2 * u) * f32                           # double-buffered weights
    proj = b * (t_q * u + t_k * 2 * u) * (f32 + bf16)                     # Q, KV (+bf16 copies)
    attn = b * t_q * t_k * (2 * f32 + bf16) + b * t_q * u * f32           # scores, probs, head outs
    return io_blocks + weights + proj + attn


def _choose_batch_block(n, t_q, t_k, d_q, d_k, u, *, target_rows=512,
                        vmem_budget=24 << 20):
    """Batch block targeting ~target_rows projection rows, capped by a VMEM
    budget (keeps the per-head score matrix bounded, v7x-safe), and split so
    the grid has >= 2 steps when possible (keeps both v7x TensorCores busy)."""
    b = max(1, min(n, target_rows // max(t_q, 1)))
    while b > 1 and _estimate_vmem_bytes(b, t_q, t_k, d_q, d_k, u) > vmem_budget:
        b -= 1
    if b >= n and n > 1:
        b = (n + 1) // 2          # guarantee at least two grid steps
    return b


def fuse_kv_weights(w_key, w_value):
    """Fuse K/V projection weights into [Dk, 2U].  Call once (hoisted out of
    the per-forward path), then reuse for every multihead_forward call."""
    return jnp.concatenate([w_key, w_value], axis=1)


def multihead_forward(query, key, w_query, w_kv, *, num_heads, key_dim):
    """Pallas wrapper.

    query: [N, T_q, Dq] f32, key: [N, T_k, Dk] f32,
    w_query: [Dq, U], w_kv: [Dk, 2U] (from fuse_kv_weights).
    Returns [N, T_q, U] f32.
    """
    N, T_q, Dq = query.shape
    Nk, T_k, Dk = key.shape
    assert Nk == N
    U = w_query.shape[1]
    assert w_kv.shape == (Dk, 2 * U)
    assert U % num_heads == 0

    B_blk = _choose_batch_block(N, T_q, T_k, Dq, Dk, U)
    grid_n = int(pl.cdiv(N, B_blk))
    N_pad = grid_n * B_blk
    if N_pad != N:
        # No divisor requirement on N: pad the batch, slice the result back.
        query = jnp.pad(query, ((0, N_pad - N), (0, 0), (0, 0)))
        key = jnp.pad(key, ((0, N_pad - N), (0, 0), (0, 0)))

    vmem_limit = int(min(64 << 20,
                         max(32 << 20,
                             2 * _estimate_vmem_bytes(B_blk, T_q, T_k, Dq, Dk, U))))

    kernel = functools.partial(_multihead_kernel,
                               num_heads=num_heads, key_dim=key_dim)

    out = pl.pallas_call(
        kernel,
        out_shape=jax.ShapeDtypeStruct((N_pad, T_q, U), jnp.float32),
        grid_spec=pltpu.PrefetchScalarGridSpec(
            num_scalar_prefetch=0,
            grid=(grid_n,),
            in_specs=[
                pl.BlockSpec((B_blk, T_q, Dq), lambda n: (n, 0, 0)),   # query
                pl.BlockSpec((B_blk, T_k, Dk), lambda n: (n, 0, 0)),   # key
                # Constant index_map -> fetched once across the whole grid.
                pl.BlockSpec((Dq, U), lambda n: (0, 0)),               # W_query
                pl.BlockSpec((Dk, 2 * U), lambda n: (0, 0)),           # W_key|W_value
            ],
            out_specs=pl.BlockSpec((B_blk, T_q, U), lambda n: (n, 0, 0)),
        ),
        compiler_params=pltpu.CompilerParams(
            dimension_semantics=("parallel",),
            vmem_limit_bytes=vmem_limit),
    )(query, key, w_query, w_kv)

    return out[:N] if N_pad != N else out


def multihead_reference(query, key, w_query, w_key, w_value, *, num_heads, key_dim):
    """Pure-JAX f32 reference reproducing the PyTorch forward exactly."""
    Q = query @ w_query          # [N, T_q, U]
    K = key @ w_key              # [N, T_k, U]
    V = key @ w_value            # [N, T_k, U]
    Qh = jnp.stack(jnp.split(Q, num_heads, axis=2), axis=0)
    Kh = jnp.stack(jnp.split(K, num_heads, axis=2), axis=0)
    Vh = jnp.stack(jnp.split(V, num_heads, axis=2), axis=0)
    scores = jnp.einsum("hnqd,hnkd->hnqk", Qh, Kh) / (float(key_dim) ** 0.5)
    scores = jax.nn.softmax(scores, axis=3)
    out = jnp.einsum("hnqk,hnkd->hnqd", scores, Vh)      # [h, N, T_q, d_h]
    out = jnp.concatenate(jnp.split(out, num_heads, axis=0), axis=3)[0]
    return out


if __name__ == "__main__":
    # Small, module-consistent shapes.  num_units=128 keeps the output store
    # lane-dense (128-lane multiple); d_h = 32 per head.
    N, T_q, T_k = 2, 8, 8
    query_dim, key_dim_feat = 16, 16
    num_units, num_heads = 128, 4

    root = jax.random.PRNGKey(0)
    kq, kk, kwq, kwk, kwv = jax.random.split(root, 5)

    query = jax.random.normal(kq, (N, T_q, query_dim), dtype=jnp.float32)
    key = jax.random.normal(kk, (N, T_k, key_dim_feat), dtype=jnp.float32)

    # Deterministic xavier-uniform-like init; stored as [in, out].
    def xavier(k, fan_in, fan_out):
        limit = (6.0 / (fan_in + fan_out)) ** 0.5
        return jax.random.uniform(k, (fan_in, fan_out), jnp.float32, -limit, limit)

    w_query = xavier(kwq, query_dim, num_units)
    w_key = xavier(kwk, key_dim_feat, num_units)
    w_value = xavier(kwv, key_dim_feat, num_units)

    # Fuse once (hoisted out of the per-call forward path).
    w_kv = fuse_kv_weights(w_key, w_value)

    out = multihead_forward(query, key, w_query, w_kv,
                            num_heads=num_heads, key_dim=key_dim_feat)
    out = jax.block_until_ready(out)

    ref = multihead_reference(query, key, w_query, w_key, w_value,
                              num_heads=num_heads, key_dim=key_dim_feat)
    assert out.shape == (N, T_q, num_units)
    # Tolerance covers bf16 MXU operands (f32 accumulation) vs the pure-f32
    # reference; expected max abs error is ~1e-2 at these magnitudes.
    max_err = float(jnp.max(jnp.abs(out - ref)))
    assert jnp.allclose(out, ref, atol=2e-2, rtol=2e-2), (
        f"mismatch vs reference (max abs err {max_err})")

    print("KERNEL_OK")
</pallas_src>

<mosaic_0001>
module attributes {stable_mosaic.version = 11 : i64} {
  func.func @_multihead_kernel(%arg0: i32, %arg1: memref<1x8x16xf32, #tpu.memory_space<vmem>>, %arg2: memref<1x8x16xf32, #tpu.memory_space<vmem>>, %arg3: memref<16x128xf32, #tpu.memory_space<vmem>>, %arg4: memref<16x256xf32, #tpu.memory_space<vmem>>, %arg5: memref<1x8x128xf32, #tpu.memory_space<vmem>>) attributes {dimension_semantics = [#tpu.dimension_semantics<parallel>], iteration_bounds = array<i64: 2>, scalar_prefetch = 0 : i64, scratch_operands = 0 : i64, tpu.core_type = #tpu.core_type<tc>, window_params = [{transform_indices = @transform_0, window_bounds = array<i64: 1, 8, 16>}, {transform_indices = @transform_1, window_bounds = array<i64: 1, 8, 16>}, {pipeline_mode = #tpu.pipeline_mode<synchronous>, transform_indices = @transform_2, window_bounds = array<i64: 16, 128>}, {pipeline_mode = #tpu.pipeline_mode<synchronous>, transform_indices = @transform_3, window_bounds = array<i64: 16, 256>}, {transform_indices = @transform_4, window_bounds = array<i64: 1, 8, 128>}]} {
    %c0 = arith.constant 0 : index
    %c0_0 = arith.constant 0 : index
    %c0_1 = arith.constant 0 : index
    %0 = vector.load %arg1[%c0, %c0_0, %c0_1] : memref<1x8x16xf32, #tpu.memory_space<vmem>>, vector<1x8x16xf32>
    %1 = vector.shape_cast %0 : vector<1x8x16xf32> to vector<8x16xf32>
    %2 = arith.truncf %1 : vector<8x16xf32> to vector<8x16xbf16>
    %c0_2 = arith.constant 0 : index
    %c0_3 = arith.constant 0 : index
    %c0_4 = arith.constant 0 : index
    %3 = vector.load %arg2[%c0_2, %c0_3, %c0_4] : memref<1x8x16xf32, #tpu.memory_space<vmem>>, vector<1x8x16xf32>
    %4 = vector.shape_cast %3 : vector<1x8x16xf32> to vector<8x16xf32>
    %5 = arith.truncf %4 : vector<8x16xf32> to vector<8x16xbf16>
    %c0_5 = arith.constant 0 : index
    %c0_6 = arith.constant 0 : index
    %6 = vector.load %arg3[%c0_5, %c0_6] : memref<16x128xf32, #tpu.memory_space<vmem>>, vector<16x128xf32>
    %7 = arith.truncf %6 : vector<16x128xf32> to vector<16x128xbf16>
    %c0_7 = arith.constant 0 : index
    %c0_8 = arith.constant 0 : index
    %8 = vector.load %arg4[%c0_7, %c0_8] : memref<16x256xf32, #tpu.memory_space<vmem>>, vector<16x256xf32>
    %9 = arith.truncf %8 : vector<16x256xf32> to vector<16x256xbf16>
    %cst = arith.constant dense<0.000000e+00> : vector<8x128xf32>
    %10 = tpu.matmul %2, %7, %cst {dimension_numbers = #tpu.dot_dimension_numbers<[1], [0], [0], [1], [0, 0, 1, 1], [], []>} : vector<8x16xbf16>, vector<16x128xbf16>, vector<8x128xf32> -> vector<8x128xf32>
    %cst_9 = arith.constant 2.500000e-01 : f32
    %11 = vector.broadcast %cst_9 : f32 to vector<8x128xf32>
    %12 = arith.mulf %10, %11 : vector<8x128xf32>
    %cst_10 = arith.constant dense<0.000000e+00> : vector<8x256xf32>
    %13 = tpu.matmul %5, %9, %cst_10 {dimension_numbers = #tpu.dot_dimension_numbers<[1], [0], [0], [1], [0, 0, 1, 1], [], []>} : vector<8x16xbf16>, vector<16x256xbf16>, vector<8x256xf32> -> vector<8x256xf32>
    %14 = vector.shape_cast %12 : vector<8x128xf32> to vector<1x8x128xf32>
    %15 = arith.truncf %14 : vector<1x8x128xf32> to vector<1x8x128xbf16>
    %16 = vector.extract_strided_slice %13 {offsets = [0, 0], sizes = [8, 128], strides = [1, 1]} : vector<8x256xf32> to vector<8x128xf32>
    %17 = vector.shape_cast %16 : vector<8x128xf32> to vector<1x8x128xf32>
    %18 = arith.truncf %17 : vector<1x8x128xf32> to vector<1x8x128xbf16>
    %19 = vector.extract_strided_slice %13 {offsets = [0, 128], sizes = [8, 128], strides = [1, 1]} : vector<8x256xf32> to vector<8x128xf32>
    %20 = vector.shape_cast %19 : vector<8x128xf32> to vector<1x8x128xf32>
    %21 = arith.truncf %20 : vector<1x8x128xf32> to vector<1x8x128xbf16>
    %22 = vector.extract_strided_slice %15 {offsets = [0, 0, 0], sizes = [1, 8, 32], strides = [1, 1, 1]} : vector<1x8x128xbf16> to vector<1x8x32xbf16>
    %23 = vector.extract_strided_slice %18 {offsets = [0, 0, 0], sizes = [1, 8, 32], strides = [1, 1, 1]} : vector<1x8x128xbf16> to vector<1x8x32xbf16>
    %24 = vector.extract_strided_slice %21 {offsets = [0, 0, 0], sizes = [1, 8, 32], strides = [1, 1, 1]} : vector<1x8x128xbf16> to vector<1x8x32xbf16>
    "tpu.trace_start"() <{level = 10 : i32, message = "bqd,bkd->bqk"}> : () -> ()
    %cst_11 = arith.constant dense<0.000000e+00> : vector<1x8x8xf32>
    %25 = tpu.matmul %22, %23, %cst_11 {dimension_numbers = #tpu.dot_dimension_numbers<[2], [2], [1], [1], [0, 0, 0, 1, 1, 1], [0], [0]>} : vector<1x8x32xbf16>, vector<1x8x32xbf16>, vector<1x8x8xf32> -> vector<1x8x8xf32>
    "tpu.trace_stop"() : () -> ()
    %cst_12 = arith.constant dense<0xFF800000> : vector<1x8xf32>
    %26 = vector.multi_reduction <maximumf>, %25, %cst_12 [2] : vector<1x8x8xf32> to vector<1x8xf32>
    %27 = vector.shape_cast %26 : vector<1x8xf32> to vector<1x8x1xf32>
    %28 = vector.broadcast %27 : vector<1x8x1xf32> to vector<1x8x8xf32>
    %29 = arith.subf %25, %28 : vector<1x8x8xf32>
    %30 = math.exp %29 : vector<1x8x8xf32>
    %cst_13 = arith.constant dense<0.000000e+00> : vector<1x8xf32>
    %31 = vector.multi_reduction <add>, %30, %cst_13 [2] : vector<1x8x8xf32> to vector<1x8xf32>
    %32 = vector.shape_cast %31 : vector<1x8xf32> to vector<1x8x1xf32>
    %33 = tpu.reciprocal %32 : vector<1x8x1xf32> -> vector<1x8x1xf32>
    %34 = vector.broadcast %33 : vector<1x8x1xf32> to vector<1x8x8xf32>
    %35 = arith.mulf %30, %34 : vector<1x8x8xf32>
    %36 = arith.truncf %35 : vector<1x8x8xf32> to vector<1x8x8xbf16>
    "tpu.trace_start"() <{level = 10 : i32, message = "bqk,bkd->bqd"}> : () -> ()
    %cst_14 = arith.constant dense<0.000000e+00> : vector<1x8x32xf32>
    %37 = tpu.matmul %36, %24, %cst_14 {dimension_numbers = #tpu.dot_dimension_numbers<[2], [1], [1], [2], [0, 0, 0, 1, 1, 2], [0], [0]>} : vector<1x8x8xbf16>, vector<1x8x32xbf16>, vector<1x8x32xf32> -> vector<1x8x32xf32>
    "tpu.trace_stop"() : () -> ()
    %38 = vector.extract_strided_slice %15 {offsets = [0, 0, 32], sizes = [1, 8, 32], strides = [1, 1, 1]} : vector<1x8x128xbf16> to vector<1x8x32xbf16>
    %39 = vector.extract_strided_slice %18 {offsets = [0, 0, 32], sizes = [1, 8, 32], strides = [1, 1, 1]} : vector<1x8x128xbf16> to vector<1x8x32xbf16>
    %40 = vector.extract_strided_slice %21 {offsets = [0, 0, 32], sizes = [1, 8, 32], strides = [1, 1, 1]} : vector<1x8x128xbf16> to vector<1x8x32xbf16>
    "tpu.trace_start"() <{level = 10 : i32, message = "bqd,bkd->bqk"}> : () -> ()
    %cst_15 = arith.constant dense<0.000000e+00> : vector<1x8x8xf32>
    %41 = tpu.matmul %38, %39, %cst_15 {dimension_numbers = #tpu.dot_dimension_numbers<[2], [2], [1], [1], [0, 0, 0, 1, 1, 1], [0], [0]>} : vector<1x8x32xbf16>, vector<1x8x32xbf16>, vector<1x8x8xf32> -> vector<1x8x8xf32>
    "tpu.trace_stop"() : () -> ()
    %cst_16 = arith.constant dense<0xFF800000> : vector<1x8xf32>
    %42 = vector.multi_reduction <maximumf>, %41, %cst_16 [2] : vector<1x8x8xf32> to vector<1x8xf32>
    %43 = vector.shape_cast %42 : vector<1x8xf32> to vector<1x8x1xf32>
    %44 = vector.broadcast %43 : vector<1x8x1xf32> to vector<1x8x8xf32>
    %45 = arith.subf %41, %44 : vector<1x8x8xf32>
    %46 = math.exp %45 : vector<1x8x8xf32>
    %cst_17 = arith.constant dense<0.000000e+00> : vector<1x8xf32>
    %47 = vector.multi_reduction <add>, %46, %cst_17 [2] : vector<1x8x8xf32> to vector<1x8xf32>
    %48 = vector.shape_cast %47 : vector<1x8xf32> to vector<1x8x1xf32>
    %49 = tpu.reciprocal %48 : vector<1x8x1xf32> -> vector<1x8x1xf32>
    %50 = vector.broadcast %49 : vector<1x8x1xf32> to vector<1x8x8xf32>
    %51 = arith.mulf %46, %50 : vector<1x8x8xf32>
    %52 = arith.truncf %51 : vector<1x8x8xf32> to vector<1x8x8xbf16>
    "tpu.trace_start"() <{level = 10 : i32, message = "bqk,bkd->bqd"}> : () -> ()
    %cst_18 = arith.constant dense<0.000000e+00> : vector<1x8x32xf32>
    %53 = tpu.matmul %52, %40, %cst_18 {dimension_numbers = #tpu.dot_dimension_numbers<[2], [1], [1], [2], [0, 0, 0, 1, 1, 2], [0], [0]>} : vector<1x8x8xbf16>, vector<1x8x32xbf16>, vector<1x8x32xf32> -> vector<1x8x32xf32>
    "tpu.trace_stop"() : () -> ()
    %54 = vector.extract_strided_slice %15 {offsets = [0, 0, 64], sizes = [1, 8, 32], strides = [1, 1, 1]} : vector<1x8x128xbf16> to vector<1x8x32xbf16>
    %55 = vector.extract_strided_slice %18 {offsets = [0, 0, 64], sizes = [1, 8, 32], strides = [1, 1, 1]} : vector<1x8x128xbf16> to vector<1x8x32xbf16>
    %56 = vector.extract_strided_slice %21 {offsets = [0, 0, 64], sizes = [1, 8, 32], strides = [1, 1, 1]} : vector<1x8x128xbf16> to vector<1x8x32xbf16>
    "tpu.trace_start"() <{level = 10 : i32, message = "bqd,bkd->bqk"}> : () -> ()
    %cst_19 = arith.constant dense<0.000000e+00> : vector<1x8x8xf32>
    %57 = tpu.matmul %54, %55, %cst_19 {dimension_numbers = #tpu.dot_dimension_numbers<[2], [2], [1], [1], [0, 0, 0, 1, 1, 1], [0], [0]>} : vector<1x8x32xbf16>, vector<1x8x32xbf16>, vector<1x8x8xf32> -> vector<1x8x8xf32>
    "tpu.trace_stop"() : () -> ()
    %cst_20 = arith.constant dense<0xFF800000> : vector<1x8xf32>
    %58 = vector.multi_reduction <maximumf>, %57, %cst_20 [2] : vector<1x8x8xf32> to vector<1x8xf32>
    %59 = vector.shape_cast %58 : vector<1x8xf32> to vector<1x8x1xf32>
    %60 = vector.broadcast %59 : vector<1x8x1xf32> to vector<1x8x8xf32>
    %61 = arith.subf %57, %60 : vector<1x8x8xf32>
    %62 = math.exp %61 : vector<1x8x8xf32>
    %cst_21 = arith.constant dense<0.000000e+00> : vector<1x8xf32>
    %63 = vector.multi_reduction <add>, %62, %cst_21 [2] : vector<1x8x8xf32> to vector<1x8xf32>
    %64 = vector.shape_cast %63 : vector<1x8xf32> to vector<1x8x1xf32>
    %65 = tpu.reciprocal %64 : vector<1x8x1xf32> -> vector<1x8x1xf32>
    %66 = vector.broadcast %65 : vector<1x8x1xf32> to vector<1x8x8xf32>
    %67 = arith.mulf %62, %66 : vector<1x8x8xf32>
    %68 = arith.truncf %67 : vector<1x8x8xf32> to vector<1x8x8xbf16>
    "tpu.trace_start"() <{level = 10 : i32, message = "bqk,bkd->bqd"}> : () -> ()
    %cst_22 = arith.constant dense<0.000000e+00> : vector<1x8x32xf32>
    %69 = tpu.matmul %68, %56, %cst_22 {dimension_numbers = #tpu.dot_dimension_numbers<[2], [1], [1], [2], [0, 0, 0, 1, 1, 2], [0], [0]>} : vector<1x8x8xbf16>, vector<1x8x32xbf16>, vector<1x8x32xf32> -> vector<1x8x32xf32>
    "tpu.trace_stop"() : () -> ()
    %70 = vector.extract_strided_slice %15 {offsets = [0, 0, 96], sizes = [1, 8, 32], strides = [1, 1, 1]} : vector<1x8x128xbf16> to vector<1x8x32xbf16>
    %71 = vector.extract_strided_slice %18 {offsets = [0, 0, 96], sizes = [1, 8, 32], strides = [1, 1, 1]} : vector<1x8x128xbf16> to vector<1x8x32xbf16>
    %72 = vector.extract_strided_slice %21 {offsets = [0, 0, 96], sizes = [1, 8, 32], strides = [1, 1, 1]} : vector<1x8x128xbf16> to vector<1x8x32xbf16>
    "tpu.trace_start"() <{level = 10 : i32, message = "bqd,bkd->bqk"}> : () -> ()
    %cst_23 = arith.constant dense<0.000000e+00> : vector<1x8x8xf32>
    %73 = tpu.matmul %70, %71, %cst_23 {dimension_numbers = #tpu.dot_dimension_numbers<[2], [2], [1], [1], [0, 0, 0, 1, 1, 1], [0], [0]>} : vector<1x8x32xbf16>, vector<1x8x32xbf16>, vector<1x8x8xf32> -> vector<1x8x8xf32>
    "tpu.trace_stop"() : () -> ()
    %cst_24 = arith.constant dense<0xFF800000> : vector<1x8xf32>
    %74 = vector.multi_reduction <maximumf>, %73, %cst_24 [2] : vector<1x8x8xf32> to vector<1x8xf32>
    %75 = vector.shape_cast %74 : vector<1x8xf32> to vector<1x8x1xf32>
    %76 = vector.broadcast %75 : vector<1x8x1xf32> to vector<1x8x8xf32>
    %77 = arith.subf %73, %76 : vector<1x8x8xf32>
    %78 = math.exp %77 : vector<1x8x8xf32>
    %cst_25 = arith.constant dense<0.000000e+00> : vector<1x8xf32>
    %79 = vector.multi_reduction <add>, %78, %cst_25 [2] : vector<1x8x8xf32> to vector<1x8xf32>
    %80 = vector.shape_cast %79 : vector<1x8xf32> to vector<1x8x1xf32>
    %81 = tpu.reciprocal %80 : vector<1x8x1xf32> -> vector<1x8x1xf32>
    %82 = vector.broadcast %81 : vector<1x8x1xf32> to vector<1x8x8xf32>
    %83 = arith.mulf %78, %82 : vector<1x8x8xf32>
    %84 = arith.truncf %83 : vector<1x8x8xf32> to vector<1x8x8xbf16>
    "tpu.trace_start"() <{level = 10 : i32, message = "bqk,bkd->bqd"}> : () -> ()
    %cst_26 = arith.constant dense<0.000000e+00> : vector<1x8x32xf32>
    %85 = tpu.matmul %84, %72, %cst_26 {dimension_numbers = #tpu.dot_dimension_numbers<[2], [1], [1], [2], [0, 0, 0, 1, 1, 2], [0], [0]>} : vector<1x8x8xbf16>, vector<1x8x32xbf16>, vector<1x8x32xf32> -> vector<1x8x32xf32>
    "tpu.trace_stop"() : () -> ()
    %86 = tpu.concatenate %37, %53, %69, %85 in 2 : vector<1x8x32xf32>, vector<1x8x32xf32>, vector<1x8x32xf32>, vector<1x8x32xf32> -> vector<1x8x128xf32>
    %c0_27 = arith.constant 0 : index
    %c0_28 = arith.constant 0 : index
    %c0_29 = arith.constant 0 : index
    %87 = vector.load %arg5[%c0_27, %c0_28, %c0_29] : memref<1x8x128xf32, #tpu.memory_space<vmem>>, vector<1x8x128xf32>
    tpu.vector_store %arg5[%c0_27, %c0_28, %c0_29], %86 {strides = array<i32>} : memref<1x8x128xf32, #tpu.memory_space<vmem>>, vector<1x8x128xf32>,
    return
  }
  func.func @transform_0(%arg0: i32) -> (i32, i32, i32) {
    %c0_i32 = arith.constant 0 : i32
    %c0_i32_0 = arith.constant 0 : i32
    %c0_i32_1 = arith.constant 0 : i32
    return %arg0, %c0_i32, %c0_i32_0 : i32, i32, i32
  }
  func.func @transform_1(%arg0: i32) -> (i32, i32, i32) {
    %c0_i32 = arith.constant 0 : i32
    %c0_i32_0 = arith.constant 0 : i32
    %c0_i32_1 = arith.constant 0 : i32
    return %arg0, %c0_i32, %c0_i32_0 : i32, i32, i32
  }
  func.func @transform_2(%arg0: i32) -> (i32, i32) {
    %c0_i32 = arith.constant 0 : i32
    %c0_i32_0 = arith.constant 0 : i32
    %c0_i32_1 = arith.constant 0 : i32
    return %c0_i32, %c0_i32_0 : i32, i32
  }
  func.func @transform_3(%arg0: i32) -> (i32, i32) {
    %c0_i32 = arith.constant 0 : i32
    %c0_i32_0 = arith.constant 0 : i32
    %c0_i32_1 = arith.constant 0 : i32
    return %c0_i32, %c0_i32_0 : i32, i32
  }
  func.func @transform_4(%arg0: i32) -> (i32, i32, i32) {
    %c0_i32 = arith.constant 0 : i32
    %c0_i32_0 = arith.constant 0 : i32
    %c0_i32_1 = arith.constant 0 : i32
    return %arg0, %c0_i32, %c0_i32_0 : i32, i32, i32
  }
}

</mosaic_0001>

<llo_original>
// kernel: tpu_custom_call.1
$region0: #{tpu_custom_call.1}
  #allocation0 [shape = 'u32[]', space=smem, size = 0x4, offset = 0x4, fixed_abs, tag = 'smem constant byte address 0x4 - core index']
  #allocation1 [shape = 'u32[72,128]{1,0:T(1,128)}', space=vmem, size = 0x9000, scoped, tag = 'internal scratch']
  %s0 = inlined_call_operand.hbm [shape: f32[2,8,16], index: 0, kind: input, shape index: {}]
  %s1 = inlined_call_operand.hbm [shape: f32[2,8,16], index: 1, kind: input, shape index: {}]
  %s2 = inlined_call_operand.hbm [shape: f32[16,128], index: 2, kind: input, shape index: {}]
  %s3 = inlined_call_operand.hbm [shape: f32[16,256], index: 3, kind: input, shape index: {}]
  %s4 = inlined_call_operand.hbm [shape: f32[2,8,128], index: 4, kind: output, shape index: {}]
  %s5 = sld [smem:[#allocation0]]
  $region65: #{tpu_custom_call.1} parent=0
    _
  %s7 = ssub.s32 1, %s5
  %s8 = scalar_select 0, %s7, %s5
  $region1: #{tpu_custom_call.1} parent=0
    #allocation2 [shape = 'u8[8192]{0}', space=vmem, size = 0x2000, scoped, tag = 'input window, operand 0']
    #allocation3 [shape = 's32[2]{0}', space=sflag, size = 0x8, scoped, tag = 'scoped memory for tpu_custom_call.1']
    #allocation4 [shape = 's32[2]{0}', space=sflag, size = 0x8, scoped, tag = 'scoped memory for tpu_custom_call.1']
    #allocation5 [shape = 'u8[8192]{0}', space=vmem, size = 0x2000, scoped, tag = 'input window, operand 1']
    #allocation6 [shape = 's32[2]{0}', space=sflag, size = 0x8, scoped, tag = 'scoped memory for tpu_custom_call.1']
    #allocation7 [shape = 'u8[8192]{0}', space=vmem, size = 0x2000, scoped, tag = 'input window, operand 2, single buffered']
    #allocation8 [shape = 'u8[16384]{0}', space=vmem, size = 0x4000, scoped, tag = 'input window, operand 3, single buffered']
    #allocation9 [shape = 's32[1]{0}', space=sflag, size = 0x4, scoped, tag = 'scoped memory for tpu_custom_call.1']
    #allocation10 [shape = 'u8[8192]{0}', space=vmem, size = 0x2000, scoped, tag = 'output window, operand 0']
    %9 = vsyncpa [#allocation3], 0
    %s10 = scalar_lea.sflag [#allocation3], 1
    %11 = vsyncpa %s10, 0
    %12 = vsyncpa [#allocation6], 0
    %s13 = scalar_lea.sflag [#allocation6], 1
    %14 = vsyncpa %s13, 0
    %15 = vsyncpa [#allocation9], 0
    %16 = vsyncpa [#allocation4], 0
    %s17 = scalar_lea.sflag [#allocation4], 1
    %18 = vsyncpa %s17, 0
    loop: start=0, step=1, limit=4
    $region2: #{tpu_custom_call.1} parent=1 // loop_pre_header
      _
    $region3: #{tpu_custom_call.1} parent=1 // loop_header
      %s20 = sphi 0, %s24
      %p21 = scmp.ge.s32.totalorder %s20, 4
      %s30 = sphi 0, %s32
      %s33 = sphi 0, %s30
      %s34 = sphi 0, %s33
      %s50 = sphi 0, %s34
      %s56 = sphi 0, %s58
      %s59 = sphi 0, %s56
      %s60 = sphi 0, %s59
      %s76 = sphi 0, %s60
      %s80 = sphi 0, %s80
      %s82 = sphi 0, %s80
      %s83 = sphi 0, %s82
      %s97 = sphi 0, %s83
      %s101 = sphi 0, %s101
      %s103 = sphi 0, %s101
      %s104 = sphi 0, %s103
      %s118 = sphi 0, %s104
      %s124 = sphi 0, %s126
      %s127 = sphi 0, %s124
      %s128 = sphi 0, %s127
      %s144 = sphi 0, %s128
    $region4: #{tpu_custom_call.1} parent=1 // loop_header_branch
      %23 = sbr.rel (%p21) target = $region8
    $region5: #{tpu_custom_call.1} parent=1 // loop_body
      %s25 = ssub.s32 %s20, 1
      %s26 = ssub.s32 %s20, 2
      %s27 = sadd.s32 %s20, 1
      %s28 = ssub.s32 %s20, %s27
      %p29 = scmp.eq.s32.totalorder %s28, 0
      %s31 = sadd.s32 %s30, 1
      %s32 = scalar_select %p29, %s30, %s31
      %p35 = pneg %p29
      %p36 = scmp.eq.s32.totalorder %s20, 1
      %p37 = por %p35, %p36
      %p38 = scmp.ne.s32.totalorder %s30, %s33
      %p39 = scmp.eq.s32.totalorder %s20, 0
      %p40 = por %p38, %p39
      %p41 = scmp.ne.s32.totalorder %s30, %s33
      %p42 = scmp.eq.s32.totalorder %s25, 1
      %p43 = por %p41, %p42
      %p44 = scmp.ne.s32.totalorder %s33, %s34
      %p45 = scmp.eq.s32.totalorder %s25, 0
      %p46 = por %p44, %p45
      %p47 = scmp.ne.s32.totalorder %s33, %s34
      %p48 = scmp.eq.s32.totalorder %s26, 1
      %p49 = por %p47, %p48
      %p51 = scmp.ne.s32.totalorder %s34, %s50
      %p52 = scmp.eq.s32.totalorder %s26, 0
      %p53 = por %p51, %p52
      %s54 = ssub.s32 %s20, %s27
      %p55 = scmp.eq.s32.totalorder %s54, 0
      %s57 = sadd.s32 %s56, 1
      %s58 = scalar_select %p55, %s56, %s57
      %p61 = pneg %p55
      %p62 = scmp.eq.s32.totalorder %s20, 1
      %p63 = por %p61, %p62
      %p64 = scmp.ne.s32.totalorder %s56, %s59
      %p65 = scmp.eq.s32.totalorder %s20, 0
      %p66 = por %p64, %p65
      %p67 = scmp.ne.s32.totalorder %s56, %s59
      %p68 = scmp.eq.s32.totalorder %s25, 1
      %p69 = por %p67, %p68
      %p70 = scmp.ne.s32.totalorder %s59, %s60
      %p71 = scmp.eq.s32.totalorder %s25, 0
      %p72 = por %p70, %p71
      %p73 = scmp.ne.s32.totalorder %s59, %s60
      %p74 = scmp.eq.s32.totalorder %s26, 1
      %p75 = por %p73, %p74
      %p77 = scmp.ne.s32.totalorder %s60, %s76
      %p78 = scmp.eq.s32.totalorder %s26, 0
      %p79 = por %p77, %p78
      %s81 = sadd.s32 %s80, 1
      %p84 = scmp.eq.s32.totalorder %s20, 1
      %p85 = scmp.ne.s32.totalorder %s80, %s82
      %p86 = scmp.eq.s32.totalorder %s20, 0
      %p87 = por %p85, %p86
      %p88 = scmp.ne.s32.totalorder %s80, %s82
      %p89 = scmp.eq.s32.totalorder %s25, 1
      %p90 = por %p88, %p89
      %p91 = scmp.ne.s32.totalorder %s82, %s83
      %p92 = scmp.eq.s32.totalorder %s25, 0
      %p93 = por %p91, %p92
      %p94 = scmp.ne.s32.totalorder %s82, %s83
      %p95 = scmp.eq.s32.totalorder %s26, 1
      %p96 = por %p94, %p95
      %p98 = scmp.ne.s32.totalorder %s83, %s97
      %p99 = scmp.eq.s32.totalorder %s26, 0
      %p100 = por %p98, %p99
      %s102 = sadd.s32 %s101, 1
      %p105 = scmp.eq.s32.totalorder %s20, 1
      %p106 = scmp.ne.s32.totalorder %s101, %s103
      %p107 = scmp.eq.s32.totalorder %s20, 0
      %p108 = por %p106, %p107
      %p109 = scmp.ne.s32.totalorder %s101, %s103
      %p110 = scmp.eq.s32.totalorder %s25, 1
      %p111 = por %p109, %p110
      %p112 = scmp.ne.s32.totalorder %s103, %s104
      %p113 = scmp.eq.s32.totalorder %s25, 0
      %p114 = por %p112, %p113
      %p115 = scmp.ne.s32.totalorder %s103, %s104
      %p116 = scmp.eq.s32.totalorder %s26, 1
      %p117 = por %p115, %p116
      %p119 = scmp.ne.s32.totalorder %s104, %s118
      %p120 = scmp.eq.s32.totalorder %s26, 0
      %p121 = por %p119, %p120
      %s122 = ssub.s32 %s20, %s27
      %p123 = scmp.eq.s32.totalorder %s122, 0
      %s125 = sadd.s32 %s124, 1
      %s126 = scalar_select %p123, %s124, %s125
      %p129 = pneg %p123
      %p130 = scmp.eq.s32.totalorder %s20, 1
      %p131 = por %p129, %p130
      %p132 = scmp.ne.s32.totalorder %s124, %s127
      %p133 = scmp.eq.s32.totalorder %s20, 0
      %p134 = por %p132, %p133
      %p135 = scmp.ne.s32.totalorder %s124, %s127
      %p136 = scmp.eq.s32.totalorder %s25, 1
      %p137 = por %p135, %p136
      %p138 = scmp.ne.s32.totalorder %s127, %s128
      %p139 = scmp.eq.s32.totalorder %s25, 0
      %p140 = por %p138, %p139
      %p141 = scmp.ne.s32.totalorder %s127, %s128
      %p142 = scmp.eq.s32.totalorder %s26, 1
      %p143 = por %p141, %p142
      %p145 = scmp.ne.s32.totalorder %s128, %s144
      %p146 = scmp.eq.s32.totalorder %s26, 0
      %p147 = por %p145, %p146
      %p148 = scmp.le.s32.totalorder 1, %s20
      %p149 = scmp.lt.s32.totalorder %s20, 3
      %p150 = pnand %p148, %p149
      %p151 = pneg %p150
      // Predicated region
      $region9: #{tpu_custom_call.1} parent=5 // pred_check
        _
      $region10: #{tpu_custom_call.1} parent=5 // pred_check_branch
        %153 = sbr.rel (%p150) target = $region12
      $region11: #{tpu_custom_call.1} parent=5 // pred_region
        %s154 = ssub.s32 %s20, 1
        // Predicated region
        $region13: #{tpu_custom_call.1} parent=11 // pred_check
          %p155 = pneg %p93
        $region14: #{tpu_custom_call.1} parent=11 // pred_check_branch
          %157 = sbr.rel (%p155) target = $region16
        $region15: #{tpu_custom_call.1} parent=11 // pred_region
          %159 = vsyncadd [#allocation6], 0
          %s160 = sshll.u32 %s2, 4
          %s161 = int_to_ptr.hbm [resolvable:$true] %s160
          %s162 = sshll.u32 [#allocation7], 4
          %s163 = int_to_ptr.vmem [resolvable:$true] %s162
          %168 = dma.hbm_to_vmem [thread:$0]  %s161, 256, %s163, [#allocation6], 128, 128, 8
        $region16: #{tpu_custom_call.1} parent=11 // pred_fallthru
          _
        // Predicated region
        $region17: #{tpu_custom_call.1} parent=11 // pred_check
          %p169 = pneg %p114
        $region18: #{tpu_custom_call.1} parent=11 // pred_check_branch
          %171 = sbr.rel (%p169) target = $region20
        $region19: #{tpu_custom_call.1} parent=11 // pred_region
          %173 = vsyncadd [#allocation9], 0
          %s174 = sshll.u32 %s3, 4
          %s175 = int_to_ptr.hbm [resolvable:$true] %s174
          %s176 = sshll.u32 [#allocation8], 4
          %s177 = int_to_ptr.vmem [resolvable:$true] %s176
          %182 = dma.hbm_to_vmem [thread:$0]  %s175, 512, %s177, [#allocation9], 256, 256, 16
        $region20: #{tpu_custom_call.1} parent=11 // pred_fallthru
          _
      $region12: #{tpu_custom_call.1} parent=5 // pred_fallthru
        _
      %p183 = scmp.lt.s32.totalorder %s20, 2
      // Predicated region
      $region21: #{tpu_custom_call.1} parent=5 // pred_check
        %p184 = pneg %p183
      $region22: #{tpu_custom_call.1} parent=5 // pred_check_branch
        %186 = sbr.rel (%p184) target = $region24
      $region23: #{tpu_custom_call.1} parent=5 // pred_region
        // Predicated region
        $region25: #{tpu_custom_call.1} parent=23 // pred_check
          %p187 = pneg %p40
        $region26: #{tpu_custom_call.1} parent=23 // pred_check_branch
          %189 = sbr.rel (%p187) target = $region28
        $region27: #{tpu_custom_call.1} parent=23 // pred_region
          %s190 = sand.u32 %s30, 1
          %s191 = scalar_lea.sflag [#allocation3], %s190
          %s192 = sand.u32 %s30, 1
          %s193 = smul.addr %s192, 8
          %s194 = scalar_lea.vmem [#allocation2], %s193
          %196 = vsyncadd %s191, 0
          %s197 = smul.addr %s20, 8
          %s198 = scalar_lea.hbm %s0, %s197
          %s200 = sshll.u32 %s198, 4
          %s201 = int_to_ptr.hbm [resolvable:$true] %s200
          %s202 = sshll.u32 %s194, 4
          %s203 = int_to_ptr.vmem [resolvable:$true] %s202
          %205 = dma.hbm_to_vmem [thread:$0]  %s201, 128, %s203, %s191
        $region28: #{tpu_custom_call.1} parent=23 // pred_fallthru
          _
        // Predicated region
        $region29: #{tpu_custom_call.1} parent=23 // pred_check
          %p206 = pneg %p66
        $region30: #{tpu_custom_call.1} parent=23 // pred_check_branch
          %208 = sbr.rel (%p206) target = $region32
        $region31: #{tpu_custom_call.1} parent=23 // pred_region
          %s209 = sand.u32 %s20, 1
          %s210 = scalar_lea.sflag [#allocation6], %s209
          %s211 = sand.u32 %s56, 1
          %s212 = smul.addr %s211, 8
          %s213 = scalar_lea.vmem [#allocation5], %s212
          %215 = vsyncadd %s210, 0
          %s216 = smul.addr %s20, 8
          %s217 = scalar_lea.hbm %s1, %s216
          %s219 = sshll.u32 %s217, 4
          %s220 = int_to_ptr.hbm [resolvable:$true] %s219
          %s221 = sshll.u32 %s213, 4
          %s222 = int_to_ptr.vmem [resolvable:$true] %s221
          %224 = dma.hbm_to_vmem [thread:$0]  %s220, 128, %s222, %s210
        $region32: #{tpu_custom_call.1} parent=23 // pred_fallthru
          _
      $region24: #{tpu_custom_call.1} parent=5 // pred_fallthru
        _
      %p225 = scmp.le.s32.totalorder 1, %s20
      %p226 = scmp.lt.s32.totalorder %s20, 3
      %p227 = pnand %p225, %p226
      %p228 = pneg %p227
      // Predicated region
      $region33: #{tpu_custom_call.1} parent=5 // pred_check
        _
      $region34: #{tpu_custom_call.1} parent=5 // pred_check_branch
        %230 = sbr.rel (%p227) target = $region36
      $region35: #{tpu_custom_call.1} parent=5 // pred_region
        %s231 = ssub.s32 %s20, 1
        %s232 = sand.u32 %s33, 1
        %s233 = scalar_lea.sflag [#allocation3], %s232
        %s234 = sand.u32 %s33, 1
        %s235 = smul.addr %s234, 8
        %s236 = scalar_lea.vmem [#allocation2], %s235
        // Predicated region
        $region37: #{tpu_custom_call.1} parent=35 // pred_check
          %p237 = pneg %p46
        $region38: #{tpu_custom_call.1} parent=35 // pred_check_branch
          %239 = sbr.rel (%p237) target = $region40
        $region39: #{tpu_custom_call.1} parent=35 // pred_region
          %241 = dma.done %s233, 128
        $region40: #{tpu_custom_call.1} parent=35 // pred_fallthru
          _
        %s242 = sand.u32 %s25, 1
        %s243 = scalar_lea.sflag [#allocation6], %s242
        %s244 = sand.u32 %s59, 1
        %s245 = smul.addr %s244, 8
        %s246 = scalar_lea.vmem [#allocation5], %s245
        // Predicated region
        $region41: #{tpu_custom_call.1} parent=35 // pred_check
          %p247 = pneg %p72
        $region42: #{tpu_custom_call.1} parent=35 // pred_check_branch
          %249 = sbr.rel (%p247) target = $region44
        $region43: #{tpu_custom_call.1} parent=35 // pred_region
          %251 = dma.done %s243, 128
        $region44: #{tpu_custom_call.1} parent=35 // pred_fallthru
          _
        // Predicated region
        $region45: #{tpu_custom_call.1} parent=35 // pred_check
          %p252 = pneg %p93
        $region46: #{tpu_custom_call.1} parent=35 // pred_check_branch
          %254 = sbr.rel (%p252) target = $region48
        $region47: #{tpu_custom_call.1} parent=35 // pred_region
          %256 = dma.done [#allocation6], 256
        $region48: #{tpu_custom_call.1} parent=35 // pred_fallthru
          _
        // Predicated region
        $region49: #{tpu_custom_call.1} parent=35 // pred_check
          %p257 = pneg %p114
        $region50: #{tpu_custom_call.1} parent=35 // pred_check_branch
          %259 = sbr.rel (%p257) target = $region52
        $region51: #{tpu_custom_call.1} parent=35 // pred_region
          %261 = dma.done [#allocation9], 512
        $region52: #{tpu_custom_call.1} parent=35 // pred_fallthru
          _
        %s262 = sand.u32 %s33, 1
        %s263 = scalar_lea.sflag [#allocation3], %s262
        %s264 = sand.u32 %s33, 1
        %s265 = smul.addr %s264, 8
        %s266 = scalar_lea.vmem [#allocation2], %s265
        %p267 = pneg %p46
        %p268 = pneg %p43
        %s269 = sand.u32 %s25, 1
        %s270 = scalar_lea.sflag [#allocation6], %s269
        %s271 = sand.u32 %s59, 1
        %s272 = smul.addr %s271, 8
        %s273 = scalar_lea.vmem [#allocation5], %s272
        %p274 = pneg %p72
        %p275 = pneg %p69
        %p276 = pneg %p93
        %p277 = pneg %p90
        %p278 = pneg %p114
        %p279 = pneg %p111
        %p280 = pneg %p140
        %p281 = pneg %p137
        %s282 = sand.u32 %s127, 1
        %s283 = scalar_lea.sflag [#allocation4], %s282
        %s284 = sand.u32 %s127, 1
        %s285 = smul.addr %s284, 8
        %s286 = scalar_lea.vmem [#allocation10], %s285
        %v288 = vld [vmem:[%s236] sm:$0xff]
        %v289 = vpack.c.bf16 %v288, %v288
        %v290 = vld [vmem:[%s246] sm:$0xff]
        %v291 = vpack.c.bf16 %v290, %v290
        %v292 = vld [vmem:[#allocation7] sm:$0xff]
        %v293 = vld [vmem:[#allocation7 + $0x8] sm:$0xff]
        %v294 = vpack.c.bf16 %v293, %v292
        %v295 = vld [vmem:[#allocation8] sm:$0xff]
        %v296 = vld [vmem:[#allocation8 + $0x8] sm:$0xff]
        %v297 = vld [vmem:[#allocation8 + $0x10] sm:$0xff]
        %v298 = vld [vmem:[#allocation8 + $0x18] sm:$0xff]
        %v299 = vpack.c.bf16 %v297, %v295
        %v300 = vpack.c.bf16 %v298, %v296
        %vm301 = vcmask 130048
        %v303 = vsel %vm301, %v289, 0
        %305 = vmatpush.bf16.msra.mxu0 0
        %306 = vmatpush.bf16.msra.mxu0 0
        %307 = vmatpush.bf16.msra.mxu0 0
        %308 = vmatpush.bf16.msra.mxu0 0
        %309 = vmatpush.bf16.msra.mxu0 0
        %310 = vmatpush.bf16.msra.mxu0 0
        %311 = vmatpush.bf16.msra.mxu0 0
        %312 = vmatpush.bf16.msra.mxu0 %v294
        %313 = vmatmul.bf16.gmra.mxu0 %v303
        %v314 = vpop.f32.mrf.mxu0
        %v315 = vadd.f32 0.0, %v314
        %v316 = vpop.f32.mrf.mxu0
        %317 = vdwg.mxu0
        %v318 = vmul.f32 %v315, 0.25
        %v320 = vsel %vm301, %v291, 0
        %322 = vmatpush.bf16.msra.mxu0 0
        %323 = vmatpush.bf16.msra.mxu0 0
        %324 = vmatpush.bf16.msra.mxu0 0
        %325 = vmatpush.bf16.msra.mxu0 0
        %326 = vmatpush.bf16.msra.mxu0 0
        %327 = vmatpush.bf16.msra.mxu0 0
        %328 = vmatpush.bf16.msra.mxu0 0
        %329 = vmatpush.bf16.msra.mxu0 %v299
        %330 = vmatmul.bf16.gmra.mxu0 %v320
        %v331 = vpop.f32.mrf.mxu0
        %v332 = vadd.f32 0.0, %v331
        %v333 = vpop.f32.mrf.mxu0
        %334 = vdwg.mxu0
        %335 = vmatpush.bf16.msra.mxu0 0
        %336 = vmatpush.bf16.msra.mxu0 0
        %337 = vmatpush.bf16.msra.mxu0 0
        %338 = vmatpush.bf16.msra.mxu0 0
        %339 = vmatpush.bf16.msra.mxu0 0
        %340 = vmatpush.bf16.msra.mxu0 0
        %341 = vmatpush.bf16.msra.mxu0 0
        %342 = vmatpush.bf16.msra.mxu0 %v300
        %343 = vmatmul.bf16.gmra.mxu0 %v320
        %v344 = vpop.f32.mrf.mxu0
        %v345 = vadd.f32 0.0, %v344
        %v346 = vpop.f32.mrf.mxu0
        %347 = vdwg.mxu0
        %v348 = vpack.c.bf16 %v318, %v318
        %v349 = vpack.c.bf16 %v332, %v332
        %v350 = vpack.c.bf16 %v345, %v345
        %vm351 = vcmask 261120
        %v353 = vsel %vm351, %v348, 0
        %v356 = vsel %vm351, %v349, 0
        %358 = vmatpush.bf16.xpose.msra.mxu0 0
        %359 = vmatpush.bf16.xpose.msra.mxu0 0
        %360 = vmatpush.bf16.xpose.msra.mxu0 0
        %361 = vmatpush.bf16.xpose.msra.mxu0 0
        %362 = vmatpush.bf16.xpose.msra.mxu0 0
        %363 = vmatpush.bf16.xpose.msra.mxu0 0
        %364 = vmatpush.bf16.xpose.msra.mxu0 0
        %365 = vmatpush.bf16.xpose.msra.mxu0 %v356
        %366 = vmatmul.bf16.gmra.mxu0 %v353
        %v367 = vpop.f32.mrf.mxu0
        %v368 = vadd.f32 0.0, %v367
        %v369 = vpop.f32.mrf.mxu0
        %370 = vdwg.mxu0
        %vm371 = vcmask 64512
        %v372 = vsel %vm371, %v368, -inf
        %373 = vmax.xlane.f32.xlu0 %v372
        %v374 = vpop.xlane.xlu0 %373
        %v375 = vsub.f32 %v368, %v374
        %v376 = vmul.f32 %v375, 1.442695
        %v377 = vpow.pop %v376
        %v378 = vsel %vm371, %v377, 0.0
        %379 = vadd.xlane.f32.xlu0 %v378
        %v380 = vpop.xlane.xlu0 %379
        %v381 = vrcp.pop %v380
        %v382 = vmul.f32 %v380, %v381
        %v383 = vsub.f32 1.0, %v382
        %v384 = vmul.f32 %v381, %v383
        %v385 = vadd.f32 %v381, %v384
        %vm386 = vweird.f32 %v380
        %vm387 = vweird.f32 %v381
        %vm388 = vmor %vm386, %vm387
        %v389 = vsel %vm388, %v381, %v385
        %v390 = vand.u32 2147483647, %v380
        %vm391 = vcmp.eq.f32.partialorder %v390, 8.507059e+37
        %v392 = vand.u32 %v380, 2147483648
        %v393 = vor.u32 1.1754944e-38, %v392
        %v394 = vsel %vm391, %v393, %v389
        %v395 = vmul.f32 %v377, %v394
        %v396 = vpack.c.bf16 %v395, %v395
        %v398 = vsel %vm371, %v396, 0
        %vm400 = vcmask 1043456
        %v402 = vsel %vm400, %v350, 0
        %404 = vmatpush.bf16.msra.mxu0 0
        %405 = vmatpush.bf16.msra.mxu0 0
        %406 = vmatpush.bf16.msra.mxu0 0
        %407 = vmatpush.bf16.msra.mxu0 0
        %408 = vmatpush.bf16.msra.mxu0 0
        %409 = vmatpush.bf16.msra.mxu0 0
        %410 = vmatpush.bf16.msra.mxu0 0
        %411 = vmatpush.bf16.msra.mxu0 %v402
        %412 = vmatmul.bf16.gmra.mxu0 %v398
        %v413 = vpop.f32.mrf.mxu0
        %v414 = vadd.f32 0.0, %v413
        %v415 = vpop.f32.mrf.mxu0
        %416 = vdwg.mxu0
        %v418 = vunpack.c.l.b16 %v348
        %v419 = vpack.c.b16 %v418, %v418
        %420 = vrot.lane.b32.xlu0 %v419, 96
        %v421 = vpop.permute.xlu0 %420
        %v423 = vunpack.c.l.b16 %v349
        %v424 = vpack.c.b16 %v423, %v423
        %425 = vrot.lane.b32.xlu0 %v424, 96
        %v426 = vpop.permute.xlu0 %425
        %v428 = vsel %vm351, %v421, 0
        %v431 = vsel %vm351, %v426, 0
        %433 = vmatpush.bf16.xpose.msra.mxu0 0
        %434 = vmatpush.bf16.xpose.msra.mxu0 0
        %435 = vmatpush.bf16.xpose.msra.mxu0 0
        %436 = vmatpush.bf16.xpose.msra.mxu0 0
        %437 = vmatpush.bf16.xpose.msra.mxu0 0
        %438 = vmatpush.bf16.xpose.msra.mxu0 0
        %439 = vmatpush.bf16.xpose.msra.mxu0 0
        %440 = vmatpush.bf16.xpose.msra.mxu0 %v431
        %441 = vmatmul.bf16.gmra.mxu0 %v428
        %v442 = vpop.f32.mrf.mxu0
        %v443 = vadd.f32 0.0, %v442
        %v444 = vpop.f32.mrf.mxu0
        %445 = vdwg.mxu0
        %v446 = vsel %vm371, %v443, -inf
        %447 = vmax.xlane.f32.xlu0 %v446
        %v448 = vpop.xlane.xlu0 %447
        %v449 = vsub.f32 %v443, %v448
        %v450 = vmul.f32 %v449, 1.442695
        %v451 = vpow.pop %v450
        %v452 = vsel %vm371, %v451, 0.0
        %453 = vadd.xlane.f32.xlu0 %v452
        %v454 = vpop.xlane.xlu0 %453
        %v455 = vrcp.pop %v454
        %v456 = vmul.f32 %v454, %v455
        %v457 = vsub.f32 1.0, %v456
        %v458 = vmul.f32 %v455, %v457
        %v459 = vadd.f32 %v455, %v458
        %vm460 = vweird.f32 %v454
        %vm461 = vweird.f32 %v455
        %vm462 = vmor %vm460, %vm461
        %v463 = vsel %vm462, %v455, %v459
        %v464 = vand.u32 2147483647, %v454
        %vm465 = vcmp.eq.f32.partialorder %v464, 8.507059e+37
        %v466 = vand.u32 %v454, 2147483648
        %v467 = vor.u32 1.1754944e-38, %v466
        %v468 = vsel %vm465, %v467, %v463
        %v469 = vmul.f32 %v451, %v468
        %v470 = vpack.c.bf16 %v469, %v469
        %v472 = vunpack.c.l.b16 %v350
        %v473 = vpack.c.b16 %v472, %v472
        %474 = vrot.lane.b32.xlu0 %v473, 96
        %v475 = vpop.permute.xlu0 %474
        %v477 = vsel %vm371, %v470, 0
        %v480 = vsel %vm400, %v475, 0
        %482 = vmatpush.bf16.msra.mxu0 0
        %483 = vmatpush.bf16.msra.mxu0 0
        %484 = vmatpush.bf16.msra.mxu0 0
        %485 = vmatpush.bf16.msra.mxu0 0
        %486 = vmatpush.bf16.msra.mxu0 0
        %487 = vmatpush.bf16.msra.mxu0 0
        %488 = vmatpush.bf16.msra.mxu0 0
        %489 = vmatpush.bf16.msra.mxu0 %v480
        %490 = vmatmul.bf16.gmra.mxu0 %v477
        %v491 = vpop.f32.mrf.mxu0
        %v492 = vadd.f32 0.0, %v491
        %v493 = vpop.f32.mrf.mxu0
        %494 = vdwg.mxu0
        %495 = vrot.lane.b32.xlu0 %v419, 64
        %v496 = vpop.permute.xlu0 %495
        %497 = vrot.lane.b32.xlu0 %v424, 64
        %v498 = vpop.permute.xlu0 %497
        %v500 = vsel %vm351, %v496, 0
        %v503 = vsel %vm351, %v498, 0
        %505 = vmatpush.bf16.xpose.msra.mxu0 0
        %506 = vmatpush.bf16.xpose.msra.mxu0 0
        %507 = vmatpush.bf16.xpose.msra.mxu0 0
        %508 = vmatpush.bf16.xpose.msra.mxu0 0
        %509 = vmatpush.bf16.xpose.msra.mxu0 0
        %510 = vmatpush.bf16.xpose.msra.mxu0 0
        %511 = vmatpush.bf16.xpose.msra.mxu0 0
        %512 = vmatpush.bf16.xpose.msra.mxu0 %v503
        %513 = vmatmul.bf16.gmra.mxu0 %v500
        %v514 = vpop.f32.mrf.mxu0
        %v515 = vadd.f32 0.0, %v514
        %v516 = vpop.f32.mrf.mxu0
        %517 = vdwg.mxu0
        %v518 = vsel %vm371, %v515, -inf
        %519 = vmax.xlane.f32.xlu0 %v518
        %v520 = vpop.xlane.xlu0 %519
        %v521 = vsub.f32 %v515, %v520
        %v522 = vmul.f32 %v521, 1.442695
        %v523 = vpow.pop %v522
        %v524 = vsel %vm371, %v523, 0.0
        %525 = vadd.xlane.f32.xlu0 %v524
        %v526 = vpop.xlane.xlu0 %525
        %v527 = vrcp.pop %v526
        %v528 = vmul.f32 %v526, %v527
        %v529 = vsub.f32 1.0, %v528
        %v530 = vmul.f32 %v527, %v529
        %v531 = vadd.f32 %v527, %v530
        %vm532 = vweird.f32 %v526
        %vm533 = vweird.f32 %v527
        %vm534 = vmor %vm532, %vm533
        %v535 = vsel %vm534, %v527, %v531
        %v536 = vand.u32 2147483647, %v526
        %vm537 = vcmp.eq.f32.partialorder %v536, 8.507059e+37
        %v538 = vand.u32 %v526, 2147483648
        %v539 = vor.u32 1.1754944e-38, %v538
        %v540 = vsel %vm537, %v539, %v535
        %v541 = vmul.f32 %v523, %v540
        %v542 = vpack.c.bf16 %v541, %v541
        %543 = vrot.lane.b32.xlu0 %v473, 64
        %v544 = vpop.permute.xlu0 %543
        %v546 = vsel %vm371, %v542, 0
        %v549 = vsel %vm400, %v544, 0
        %551 = vmatpush.bf16.msra.mxu0 0
        %552 = vmatpush.bf16.msra.mxu0 0
        %553 = vmatpush.bf16.msra.mxu0 0
        %554 = vmatpush.bf16.msra.mxu0 0
        %555 = vmatpush.bf16.msra.mxu0 0
        %556 = vmatpush.bf16.msra.mxu0 0
        %557 = vmatpush.bf16.msra.mxu0 0
        %558 = vmatpush.bf16.msra.mxu0 %v549
        %559 = vmatmul.bf16.gmra.mxu0 %v546
        %v560 = vpop.f32.mrf.mxu0
        %v561 = vadd.f32 0.0, %v560
        %v562 = vpop.f32.mrf.mxu0
        %563 = vdwg.mxu0
        %564 = vrot.lane.b32.xlu0 %v419, 32
        %v565 = vpop.permute.xlu0 %564
        %566 = vrot.lane.b32.xlu0 %v424, 32
        %v567 = vpop.permute.xlu0 %566
        %v569 = vsel %vm351, %v565, 0
        %v572 = vsel %vm351, %v567, 0
        %574 = vmatpush.bf16.xpose.msra.mxu0 0
        %575 = vmatpush.bf16.xpose.msra.mxu0 0
        %576 = vmatpush.bf16.xpose.msra.mxu0 0
        %577 = vmatpush.bf16.xpose.msra.mxu0 0
        %578 = vmatpush.bf16.xpose.msra.mxu0 0
        %579 = vmatpush.bf16.xpose.msra.mxu0 0
        %580 = vmatpush.bf16.xpose.msra.mxu0 0
        %581 = vmatpush.bf16.xpose.msra.mxu0 %v572
        %582 = vmatmul.bf16.gmra.mxu0 %v569
        %v583 = vpop.f32.mrf.mxu0
        %v584 = vadd.f32 0.0, %v583
        %v585 = vpop.f32.mrf.mxu0
        %586 = vdwg.mxu0
        %v587 = vsel %vm371, %v584, -inf
        %588 = vmax.xlane.f32.xlu0 %v587
        %v589 = vpop.xlane.xlu0 %588
        %v590 = vsub.f32 %v584, %v589
        %v591 = vmul.f32 %v590, 1.442695
        %v592 = vpow.pop %v591
        %v593 = vsel %vm371, %v592, 0.0
        %594 = vadd.xlane.f32.xlu0 %v593
        %v595 = vpop.xlane.xlu0 %594
        %v596 = vrcp.pop %v595
        %v597 = vmul.f32 %v595, %v596
        %v598 = vsub.f32 1.0, %v597
        %v599 = vmul.f32 %v596, %v598
        %v600 = vadd.f32 %v596, %v599
        %vm601 = vweird.f32 %v595
        %vm602 = vweird.f32 %v596
        %vm603 = vmor %vm601, %vm602
        %v604 = vsel %vm603, %v596, %v600
        %v605 = vand.u32 2147483647, %v595
        %vm606 = vcmp.eq.f32.partialorder %v605, 8.507059e+37
        %v607 = vand.u32 %v595, 2147483648
        %v608 = vor.u32 1.1754944e-38, %v607
        %v609 = vsel %vm606, %v608, %v604
        %v610 = vmul.f32 %v592, %v609
        %v611 = vpack.c.bf16 %v610, %v610
        %612 = vrot.lane.b32.xlu0 %v473, 32
        %v613 = vpop.permute.xlu0 %612
        %v615 = vsel %vm371, %v611, 0
        %v618 = vsel %vm400, %v613, 0
        %620 = vmatpush.bf16.msra.mxu0 0
        %621 = vmatpush.bf16.msra.mxu0 0
        %622 = vmatpush.bf16.msra.mxu0 0
        %623 = vmatpush.bf16.msra.mxu0 0
        %624 = vmatpush.bf16.msra.mxu0 0
        %625 = vmatpush.bf16.msra.mxu0 0
        %626 = vmatpush.bf16.msra.mxu0 0
        %627 = vmatpush.bf16.msra.mxu0 %v618
        %628 = vmatmul.bf16.gmra.mxu0 %v615
        %v629 = vpop.f32.mrf.mxu0
        %v630 = vadd.f32 0.0, %v629
        %v631 = vpop.f32.mrf.mxu0
        %632 = vdwg.mxu0
        %634 = vrot.lane.b32.xlu0 %v492, 32
        %v635 = vpop.permute.xlu0 %634
        %638 = vrot.lane.b32.xlu0 %v561, 64
        %v639 = vpop.permute.xlu0 %638
        %642 = vrot.lane.b32.xlu0 %v630, 96
        %v643 = vpop.permute.xlu0 %642
        %v645 = vsel %vm351, %v414, %v635
        %vm646 = vcmask 523264
        %v647 = vsel %vm646, %v645, %v639
        %vm648 = vcmask 785408
        %v649 = vsel %vm648, %v647, %v643
        %650 = vst [vmem:[%s286] sm:$0xff] %v649
        %s651 = sand.u32 %s127, 1
        %s652 = scalar_lea.sflag [#allocation4], %s651
        %s653 = sand.u32 %s127, 1
        %s654 = smul.addr %s653, 8
        %s655 = scalar_lea.vmem [#allocation10], %s654
        // Predicated region
        $region53: #{tpu_custom_call.1} parent=35 // pred_check
          %p656 = pneg %p137
        $region54: #{tpu_custom_call.1} parent=35 // pred_check_branch
          %658 = sbr.rel (%p656) target = $region56
        $region55: #{tpu_custom_call.1} parent=35 // pred_region
          %660 = vsyncadd %s652, 0
          %s661 = smul.addr %s25, 8
          %s662 = scalar_lea.hbm %s4, %s661
          %s664 = sshll.u32 %s655, 4
          %s665 = int_to_ptr.vmem [resolvable:$true] %s664
          %s666 = sshll.u32 %s662, 4
          %s667 = int_to_ptr.hbm [resolvable:$true] %s666
          %669 = dma.vmem_to_hbm [thread:$0]  %s665, 128, %s667, %s652
        $region56: #{tpu_custom_call.1} parent=35 // pred_fallthru
          _
      $region36: #{tpu_custom_call.1} parent=5 // pred_fallthru
        _
      %p670 = scmp.le.s32.totalorder 2, %s20
      // Predicated region
      $region57: #{tpu_custom_call.1} parent=5 // pred_check
        %p671 = pneg %p670
      $region58: #{tpu_custom_call.1} parent=5 // pred_check_branch
        %673 = sbr.rel (%p671) target = $region60
      $region59: #{tpu_custom_call.1} parent=5 // pred_region
        %s674 = ssub.s32 %s20, 2
        // Predicated region
        $region61: #{tpu_custom_call.1} parent=59 // pred_check
          %p675 = pneg %p143
        $region62: #{tpu_custom_call.1} parent=59 // pred_check_branch
          %677 = sbr.rel (%p675) target = $region64
        $region63: #{tpu_custom_call.1} parent=59 // pred_region
          %s678 = sand.u32 %s128, 1
          %s679 = scalar_lea.sflag [#allocation4], %s678
          %s680 = sand.u32 %s128, 1
          %s681 = smul.addr %s680, 8
          %s682 = scalar_lea.vmem [#allocation10], %s681
          %684 = dma.done %s679, 128
        $region64: #{tpu_custom_call.1} parent=59 // pred_fallthru
          _
      $region60: #{tpu_custom_call.1} parent=5 // pred_fallthru
        _
    $region6: #{tpu_custom_call.1} parent=1 // loop_footer
      %s24 = sadd.s32 1, %s20
    $region7: #{tpu_custom_call.1} parent=1 // loop_footer_branch
      %19 = sbr.rel target = $region3
    $region8: #{tpu_custom_call.1} parent=1 // loop_exit
      _
    %685 = vsyncpa [#allocation3], 1
    %s686 = scalar_lea.sflag [#allocation3], 1
    %687 = vsyncpa %s686, 1
    %688 = vsyncpa [#allocation6], 1
    %s689 = scalar_lea.sflag [#allocation6], 1
    %690 = vsyncpa %s689, 1
    %691 = vsyncpa [#allocation9], 1
    %692 = vsyncpa [#allocation4], 1
    %s693 = scalar_lea.sflag [#allocation4], 1
    %694 = vsyncpa %s693, 1

</llo_original>
